<compile_context>
chip_gen: v5e
topology: v5e:2x2
jax: 0.10.0
libtpu: 0.0.40
codegen_flags: <defaults>
</compile_context>

<pallas_src>
import functools

import jax
import jax.numpy as jnp
from jax import lax
from jax.experimental import pallas as pl
from jax.experimental.pallas import tpu as pltpu

LANE = 128


def _folded_linear_kernel(x_ref, w_ref, b_ref, o_ref):
    # One MXU matmul (f32 accumulate) + one f32 bias add; lane-dense store.
    acc = jnp.dot(
        x_ref[...], w_ref[...],
        preferred_element_type=jnp.float32,
        precision=lax.Precision.HIGHEST,
    )
    o_ref[...] = (acc + b_ref[...]).astype(o_ref.dtype)


def fold_and_pad_params(params, compute_dtype=jnp.float32):
    """One-time weight-load step (hoisted out of the per-call forward).

    Collapses the bias-only Linear chain into a single affine map and zero-pads
    the output dim to 128 lanes so the kernel stores with unmasked vst.
    Returns (w_pad (320,128) in compute_dtype, b_pad (1,128) f32, d_out).
    """
    w_fold, b_fold = params[0]
    for wi, bi in params[1:]:
        w_fold = w_fold @ wi
        b_fold = b_fold @ wi + bi
    d_in, d_out = w_fold.shape
    n_pad = ((d_out + LANE - 1) // LANE) * LANE
    w_pad = jnp.zeros((d_in, n_pad), compute_dtype).at[:, :d_out].set(
        w_fold.astype(compute_dtype))
    b_pad = jnp.zeros((1, n_pad), jnp.float32).at[:, :d_out].set(
        b_fold.astype(jnp.float32))
    return w_pad, b_pad, d_out


def _row_tile(M, tile_m, sublane):
    """Row tile: multiple of `sublane` (or the full extent), and at least two
    grid steps whenever M allows it so v7x's two TensorCores both get work."""
    if M <= tile_m:
        half = ((-(-M // 2)) + sublane - 1) // sublane * sublane
        return half if half < M else M
    return max(sublane, (tile_m // sublane) * sublane)


@functools.partial(jax.jit, static_argnames=("tile_m",))
def mlp_forward_padded(x2d, w_pad, b_pad, tile_m=2048):
    """x2d: (M, 320); w_pad: (320, 128); b_pad: (1, 128) f32.

    Returns the lane-padded (M, 128) f32 result; the consumer slices [:, :10]
    (kept out of this function so memory-bound callers don't pay a second HBM
    pass over the output).
    """
    M, d_in = x2d.shape
    n_pad = w_pad.shape[1]
    sublane = 16 if jnp.dtype(x2d.dtype).itemsize == 2 else 8
    tm = _row_tile(M, tile_m, sublane)
    grid = (pl.cdiv(M, tm),)  # ragged last block handled by Pallas — no x copy

    cost = pl.CostEstimate(
        flops=2 * M * d_in * n_pad,
        transcendentals=0,
        bytes_accessed=(M * d_in * jnp.dtype(x2d.dtype).itemsize
                        + d_in * n_pad * jnp.dtype(w_pad.dtype).itemsize
                        + n_pad * 4
                        + M * n_pad * 4),
    )

    return pl.pallas_call(
        _folded_linear_kernel,
        out_shape=jax.ShapeDtypeStruct((M, n_pad), jnp.float32),
        grid=grid,
        in_specs=[
            pl.BlockSpec((tm, d_in), lambda i: (i, 0)),     # activations
            pl.BlockSpec((d_in, n_pad), lambda i: (0, 0)),  # folded weight
            pl.BlockSpec((1, n_pad), lambda i: (0, 0)),     # folded bias (f32)
        ],
        out_specs=pl.BlockSpec((tm, n_pad), lambda i: (i, 0)),
        compiler_params=pltpu.CompilerParams(
            dimension_semantics=("parallel",)),
        cost_estimate=cost,
    )(x2d, w_pad, b_pad)


def make_params(key):
    """Deterministic Linear params matching torch.nn.Linear init shapes.

    PyTorch Linear weight is (out, in); we store the transpose (in, out) and
    bias as (1, out) so the computation is x @ W + b directly.
    """
    dims = [320, 160, 80, 40, 20, 10]
    params = []
    for d_in, d_out in zip(dims[:-1], dims[1:]):
        key, kw, kb = jax.random.split(key, 3)
        bound = 1.0 / (d_in ** 0.5)
        w = jax.random.uniform(kw, (d_in, d_out), jnp.float32, -bound, bound)
        b = jax.random.uniform(kb, (1, d_out), jnp.float32, -bound, bound)
        params.append((w, b))
    return params


if __name__ == "__main__":
    key = jax.random.PRNGKey(0)
    key, kx = jax.random.split(key)

    # Small input consistent with the forward pass: last dim must be 320.
    B, S, D_IN = 2, 8, 320
    x = jax.random.normal(kx, (B, S, D_IN), jnp.float32)
    params = make_params(key)
    x2d = x.reshape(-1, D_IN)                      # (16, 320)

    # Layer-by-layer plain-JAX reference (un-folded, f32).
    ref2d = x2d
    for (w, b) in params:
        ref2d = ref2d @ w + b                      # (16, 10)

    # ---- f32 path (exactness) ----
    w_pad32, b_pad, d_out = fold_and_pad_params(params, jnp.float32)
    out32_padded = jax.block_until_ready(mlp_forward_padded(x2d, w_pad32, b_pad))
    out32 = out32_padded[:, :d_out]                # consumer-side slice
    assert jnp.allclose(out32, ref2d, atol=1e-4, rtol=1e-4)

    # ---- bf16 read-path variant (halves dominant HBM read of x at large M) ----
    w_pad16, _, _ = fold_and_pad_params(params, jnp.bfloat16)
    out16_padded = jax.block_until_ready(
        mlp_forward_padded(x2d.astype(jnp.bfloat16), w_pad16, b_pad))
    out16 = out16_padded[:, :d_out]
    assert jnp.allclose(out16, ref2d, atol=3e-2, rtol=3e-2)

    out = out32.reshape(B, S, d_out)               # module-shaped output (2, 8, 10)
    out = jax.block_until_ready(out)

    print("KERNEL_OK")
</pallas_src>

<mosaic_0001>
module attributes {stable_mosaic.version = 11 : i64} {
  func.func @_folded_linear_kernel(%arg0: i32, %arg1: memref<8x320xf32, #tpu.memory_space<vmem>>, %arg2: memref<320x128xf32, #tpu.memory_space<vmem>>, %arg3: memref<1x128xf32, #tpu.memory_space<vmem>>, %arg4: memref<8x128xf32, #tpu.memory_space<vmem>>) attributes {dimension_semantics = [#tpu.dimension_semantics<parallel>], iteration_bounds = array<i64: 2>, scalar_prefetch = 0 : i64, scratch_operands = 0 : i64, tpu.core_type = #tpu.core_type<tc>, window_params = [{transform_indices = @transform_0, window_bounds = array<i64: 8, 320>}, {pipeline_mode = #tpu.pipeline_mode<synchronous>, transform_indices = @transform_1, window_bounds = array<i64: 320, 128>}, {pipeline_mode = #tpu.pipeline_mode<synchronous>, transform_indices = @transform_2, window_bounds = array<i64: 1, 128>}, {transform_indices = @transform_3, window_bounds = array<i64: 8, 128>}]} {
    %c0 = arith.constant 0 : index
    %c0_0 = arith.constant 0 : index
    %0 = vector.load %arg1[%c0, %c0_0] : memref<8x320xf32, #tpu.memory_space<vmem>>, vector<8x320xf32>
    %c0_1 = arith.constant 0 : index
    %c0_2 = arith.constant 0 : index
    %1 = vector.load %arg2[%c0_1, %c0_2] : memref<320x128xf32, #tpu.memory_space<vmem>>, vector<320x128xf32>
    %cst = arith.constant dense<0.000000e+00> : vector<8x128xf32>
    %2 = tpu.matmul %0, %1, %cst {dimension_numbers = #tpu.dot_dimension_numbers<[1], [0], [0], [1], [0, 0, 1, 1], [], []>, precision = #tpu.contract_precision<fp32>} : vector<8x320xf32>, vector<320x128xf32>, vector<8x128xf32> -> vector<8x128xf32>
    %c0_3 = arith.constant 0 : index
    %c0_4 = arith.constant 0 : index
    %3 = vector.load %arg3[%c0_3, %c0_4] : memref<1x128xf32, #tpu.memory_space<vmem>>, vector<1x128xf32>
    %4 = vector.broadcast %3 : vector<1x128xf32> to vector<8x128xf32>
    %5 = arith.addf %2, %4 : vector<8x128xf32>
    %c0_5 = arith.constant 0 : index
    %c0_6 = arith.constant 0 : index
    %6 = vector.load %arg4[%c0_5, %c0_6] : memref<8x128xf32, #tpu.memory_space<vmem>>, vector<8x128xf32>
    tpu.vector_store %arg4[%c0_5, %c0_6], %5 {strides = array<i32>} : memref<8x128xf32, #tpu.memory_space<vmem>>, vector<8x128xf32>,
    return
  }
  func.func @transform_0(%arg0: i32) -> (i32, i32) {
    %c0_i32 = arith.constant 0 : i32
    %c0_i32_0 = arith.constant 0 : i32
    return %arg0, %c0_i32 : i32, i32
  }
  func.func @transform_1(%arg0: i32) -> (i32, i32) {
    %c0_i32 = arith.constant 0 : i32
    %c0_i32_0 = arith.constant 0 : i32
    %c0_i32_1 = arith.constant 0 : i32
    return %c0_i32, %c0_i32_0 : i32, i32
  }
  func.func @transform_2(%arg0: i32) -> (i32, i32) {
    %c0_i32 = arith.constant 0 : i32
    %c0_i32_0 = arith.constant 0 : i32
    %c0_i32_1 = arith.constant 0 : i32
    return %c0_i32, %c0_i32_0 : i32, i32
  }
  func.func @transform_3(%arg0: i32) -> (i32, i32) {
    %c0_i32 = arith.constant 0 : i32
    %c0_i32_0 = arith.constant 0 : i32
    return %arg0, %c0_i32 : i32, i32
  }
}

</mosaic_0001>

<llo_original>
// kernel: mlp_forward_padded.1
$region0: #{mlp_forward_padded.1}
  #allocation0 [shape = 'u32[]', space=smem, size = 0x4, offset = 0x4, fixed_abs, tag = 'smem constant byte address 0x4 - core index']
  #allocation1 [shape = 'u32[72,128]{1,0:T(1,128)}', space=vmem, size = 0x9000, scoped, tag = 'internal scratch']
  %s0 = inlined_call_operand.hbm [shape: f32[16,320], index: 0, kind: input, shape index: {}]
  %s1 = inlined_call_operand.hbm [shape: f32[320,128], index: 1, kind: input, shape index: {}]
  %s2 = inlined_call_operand.vmem [shape: f32[1,128], index: 2, kind: input, shape index: {}]
  %s3 = inlined_call_operand.hbm [shape: f32[16,128], index: 3, kind: output, shape index: {}]
  %s4 = sld [smem:[#allocation0]]
  $region53: #{mlp_forward_padded.1} parent=0
    _
  %s6 = ssub.s32 1, %s4
  %s7 = scalar_select 0, %s6, %s4
  $region1: #{mlp_forward_padded.1} parent=0
    #allocation2 [shape = 'u8[24576]{0}', space=vmem, size = 0x6000, scoped, tag = 'input window, operand 0']
    #allocation3 [shape = 's32[2]{0}', space=sflag, size = 0x8, scoped, tag = 'scoped memory for mlp_forward_padded.1']
    #allocation4 [shape = 's32[2]{0}', space=sflag, size = 0x8, scoped, tag = 'scoped memory for mlp_forward_padded.1']
    #allocation5 [shape = 'u8[163840]{0}', space=vmem, size = 0x28000, scoped, tag = 'input window, operand 1, single buffered']
    #allocation6 [shape = 's32[1]{0}', space=sflag, size = 0x4, scoped, tag = 'scoped memory for mlp_forward_padded.1']
    #allocation7 [shape = 'u8[8192]{0}', space=vmem, size = 0x2000, scoped, tag = 'output window, operand 0']
    %8 = vsyncpa [#allocation3], 0
    %s9 = scalar_lea.sflag [#allocation3], 1
    %10 = vsyncpa %s9, 0
    %11 = vsyncpa [#allocation6], 0
    %12 = vsyncpa [#allocation4], 0
    %s13 = scalar_lea.sflag [#allocation4], 1
    %14 = vsyncpa %s13, 0
    loop: start=0, step=1, limit=4
    $region2: #{mlp_forward_padded.1} parent=1 // loop_pre_header
      _
    $region3: #{mlp_forward_padded.1} parent=1 // loop_header
      %s16 = sphi 0, %s20
      %p17 = scmp.ge.s32.totalorder %s16, 4
      %s26 = sphi 0, %s28
      %s29 = sphi 0, %s26
      %s30 = sphi 0, %s29
      %s46 = sphi 0, %s30
      %s50 = sphi 0, %s50
      %s52 = sphi 0, %s50
      %s53 = sphi 0, %s52
      %s67 = sphi 0, %s53
      %s71 = sphi 0, %s71
      %s73 = sphi 0, %s71
      %s74 = sphi 0, %s73
      %s88 = sphi 0, %s74
      %s94 = sphi 0, %s96
      %s97 = sphi 0, %s94
      %s98 = sphi 0, %s97
      %s114 = sphi 0, %s98
    $region4: #{mlp_forward_padded.1} parent=1 // loop_header_branch
      %19 = sbr.rel (%p17) target = $region8
    $region5: #{mlp_forward_padded.1} parent=1 // loop_body
      %s21 = ssub.s32 %s16, 1
      %s22 = ssub.s32 %s16, 2
      %s23 = sadd.s32 %s16, 1
      %s24 = ssub.s32 %s16, %s23
      %p25 = scmp.eq.s32.totalorder %s24, 0
      %s27 = sadd.s32 %s26, 1
      %s28 = scalar_select %p25, %s26, %s27
      %p31 = pneg %p25
      %p32 = scmp.eq.s32.totalorder %s16, 1
      %p33 = por %p31, %p32
      %p34 = scmp.ne.s32.totalorder %s26, %s29
      %p35 = scmp.eq.s32.totalorder %s16, 0
      %p36 = por %p34, %p35
      %p37 = scmp.ne.s32.totalorder %s26, %s29
      %p38 = scmp.eq.s32.totalorder %s21, 1
      %p39 = por %p37, %p38
      %p40 = scmp.ne.s32.totalorder %s29, %s30
      %p41 = scmp.eq.s32.totalorder %s21, 0
      %p42 = por %p40, %p41
      %p43 = scmp.ne.s32.totalorder %s29, %s30
      %p44 = scmp.eq.s32.totalorder %s22, 1
      %p45 = por %p43, %p44
      %p47 = scmp.ne.s32.totalorder %s30, %s46
      %p48 = scmp.eq.s32.totalorder %s22, 0
      %p49 = por %p47, %p48
      %s51 = sadd.s32 %s50, 1
      %p54 = scmp.eq.s32.totalorder %s16, 1
      %p55 = scmp.ne.s32.totalorder %s50, %s52
      %p56 = scmp.eq.s32.totalorder %s16, 0
      %p57 = por %p55, %p56
      %p58 = scmp.ne.s32.totalorder %s50, %s52
      %p59 = scmp.eq.s32.totalorder %s21, 1
      %p60 = por %p58, %p59
      %p61 = scmp.ne.s32.totalorder %s52, %s53
      %p62 = scmp.eq.s32.totalorder %s21, 0
      %p63 = por %p61, %p62
      %p64 = scmp.ne.s32.totalorder %s52, %s53
      %p65 = scmp.eq.s32.totalorder %s22, 1
      %p66 = por %p64, %p65
      %p68 = scmp.ne.s32.totalorder %s53, %s67
      %p69 = scmp.eq.s32.totalorder %s22, 0
      %p70 = por %p68, %p69
      %s72 = sadd.s32 %s71, 1
      %p75 = scmp.eq.s32.totalorder %s16, 1
      %p76 = scmp.ne.s32.totalorder %s71, %s73
      %p77 = scmp.eq.s32.totalorder %s16, 0
      %p78 = por %p76, %p77
      %p79 = scmp.ne.s32.totalorder %s71, %s73
      %p80 = scmp.eq.s32.totalorder %s21, 1
      %p81 = por %p79, %p80
      %p82 = scmp.ne.s32.totalorder %s73, %s74
      %p83 = scmp.eq.s32.totalorder %s21, 0
      %p84 = por %p82, %p83
      %p85 = scmp.ne.s32.totalorder %s73, %s74
      %p86 = scmp.eq.s32.totalorder %s22, 1
      %p87 = por %p85, %p86
      %p89 = scmp.ne.s32.totalorder %s74, %s88
      %p90 = scmp.eq.s32.totalorder %s22, 0
      %p91 = por %p89, %p90
      %s92 = ssub.s32 %s16, %s23
      %p93 = scmp.eq.s32.totalorder %s92, 0
      %s95 = sadd.s32 %s94, 1
      %s96 = scalar_select %p93, %s94, %s95
      %p99 = pneg %p93
      %p100 = scmp.eq.s32.totalorder %s16, 1
      %p101 = por %p99, %p100
      %p102 = scmp.ne.s32.totalorder %s94, %s97
      %p103 = scmp.eq.s32.totalorder %s16, 0
      %p104 = por %p102, %p103
      %p105 = scmp.ne.s32.totalorder %s94, %s97
      %p106 = scmp.eq.s32.totalorder %s21, 1
      %p107 = por %p105, %p106
      %p108 = scmp.ne.s32.totalorder %s97, %s98
      %p109 = scmp.eq.s32.totalorder %s21, 0
      %p110 = por %p108, %p109
      %p111 = scmp.ne.s32.totalorder %s97, %s98
      %p112 = scmp.eq.s32.totalorder %s22, 1
      %p113 = por %p111, %p112
      %p115 = scmp.ne.s32.totalorder %s98, %s114
      %p116 = scmp.eq.s32.totalorder %s22, 0
      %p117 = por %p115, %p116
      %p118 = scmp.le.s32.totalorder 1, %s16
      %p119 = scmp.lt.s32.totalorder %s16, 3
      %p120 = pnand %p118, %p119
      %p121 = pneg %p120
      // Predicated region
      $region9: #{mlp_forward_padded.1} parent=5 // pred_check
        _
      $region10: #{mlp_forward_padded.1} parent=5 // pred_check_branch
        %123 = sbr.rel (%p120) target = $region12
      $region11: #{mlp_forward_padded.1} parent=5 // pred_region
        %s124 = ssub.s32 %s16, 1
        // Predicated region
        $region13: #{mlp_forward_padded.1} parent=11 // pred_check
          %p125 = pneg %p63
        $region14: #{mlp_forward_padded.1} parent=11 // pred_check_branch
          %127 = sbr.rel (%p125) target = $region16
        $region15: #{mlp_forward_padded.1} parent=11 // pred_region
          %129 = vsyncadd [#allocation6], 0
          %s130 = sshll.u32 %s1, 4
          %s131 = int_to_ptr.hbm [resolvable:$true] %s130
          %s132 = sshll.u32 [#allocation5], 4
          %s133 = int_to_ptr.vmem [resolvable:$true] %s132
          %138 = dma.hbm_to_vmem [thread:$0]  %s131, 5120, %s133, [#allocation6], 128, 128, 8
        $region16: #{mlp_forward_padded.1} parent=11 // pred_fallthru
          _
        // Predicated region
        $region17: #{mlp_forward_padded.1} parent=11 // pred_check
          %p139 = pneg %p84
        $region18: #{mlp_forward_padded.1} parent=11 // pred_check_branch
          %141 = sbr.rel (%p139) target = $region20
        $region19: #{mlp_forward_padded.1} parent=11 // pred_region
          _
        $region20: #{mlp_forward_padded.1} parent=11 // pred_fallthru
          _
      $region12: #{mlp_forward_padded.1} parent=5 // pred_fallthru
        _
      %p142 = scmp.lt.s32.totalorder %s16, 2
      // Predicated region
      $region21: #{mlp_forward_padded.1} parent=5 // pred_check
        %p143 = pneg %p142
      $region22: #{mlp_forward_padded.1} parent=5 // pred_check_branch
        %145 = sbr.rel (%p143) target = $region24
      $region23: #{mlp_forward_padded.1} parent=5 // pred_region
        // Predicated region
        $region25: #{mlp_forward_padded.1} parent=23 // pred_check
          %p146 = pneg %p36
        $region26: #{mlp_forward_padded.1} parent=23 // pred_check_branch
          %148 = sbr.rel (%p146) target = $region28
        $region27: #{mlp_forward_padded.1} parent=23 // pred_region
          %s149 = sand.u32 %s26, 1
          %s150 = scalar_lea.sflag [#allocation3], %s149
          %s151 = sand.u32 %s26, 1
          %s152 = smul.addr %s151, 24
          %s153 = scalar_lea.vmem [#allocation2], %s152
          %155 = vsyncadd %s150, 0
          %s156 = smul.addr %s16, 3
          %s157 = smul.addr %s156, 8
          %s158 = scalar_lea.hbm %s0, %s157
          %s160 = sshll.u32 %s158, 4
          %s161 = int_to_ptr.hbm [resolvable:$true] %s160
          %s162 = sshll.u32 %s153, 4
          %s163 = int_to_ptr.vmem [resolvable:$true] %s162
          %165 = dma.hbm_to_vmem [thread:$0]  %s161, 384, %s163, %s150
        $region28: #{mlp_forward_padded.1} parent=23 // pred_fallthru
          _
      $region24: #{mlp_forward_padded.1} parent=5 // pred_fallthru
        _
      %p166 = scmp.le.s32.totalorder 1, %s16
      %p167 = scmp.lt.s32.totalorder %s16, 3
      %p168 = pnand %p166, %p167
      %p169 = pneg %p168
      // Predicated region
      $region29: #{mlp_forward_padded.1} parent=5 // pred_check
        _
      $region30: #{mlp_forward_padded.1} parent=5 // pred_check_branch
        %171 = sbr.rel (%p168) target = $region32
      $region31: #{mlp_forward_padded.1} parent=5 // pred_region
        %s172 = ssub.s32 %s16, 1
        %s173 = sand.u32 %s29, 1
        %s174 = scalar_lea.sflag [#allocation3], %s173
        %s175 = sand.u32 %s29, 1
        %s176 = smul.addr %s175, 24
        %s177 = scalar_lea.vmem [#allocation2], %s176
        // Predicated region
        $region33: #{mlp_forward_padded.1} parent=31 // pred_check
          %p178 = pneg %p42
        $region34: #{mlp_forward_padded.1} parent=31 // pred_check_branch
          %180 = sbr.rel (%p178) target = $region36
        $region35: #{mlp_forward_padded.1} parent=31 // pred_region
          %182 = dma.done %s174, 384
        $region36: #{mlp_forward_padded.1} parent=31 // pred_fallthru
          _
        // Predicated region
        $region37: #{mlp_forward_padded.1} parent=31 // pred_check
          %p183 = pneg %p63
        $region38: #{mlp_forward_padded.1} parent=31 // pred_check_branch
          %185 = sbr.rel (%p183) target = $region40
        $region39: #{mlp_forward_padded.1} parent=31 // pred_region
          %187 = dma.done [#allocation6], 5120
        $region40: #{mlp_forward_padded.1} parent=31 // pred_fallthru
          _
        %s188 = sand.u32 %s29, 1
        %s189 = scalar_lea.sflag [#allocation3], %s188
        %s190 = sand.u32 %s29, 1
        %s191 = smul.addr %s190, 24
        %s192 = scalar_lea.vmem [#allocation2], %s191
        %p193 = pneg %p42
        %p194 = pneg %p39
        %p195 = pneg %p63
        %p196 = pneg %p60
        %p197 = pneg %p84
        %p198 = pneg %p81
        %p199 = pneg %p110
        %p200 = pneg %p107
        %s201 = sand.u32 %s97, 1
        %s202 = scalar_lea.sflag [#allocation4], %s201
        %s203 = sand.u32 %s97, 1
        %s204 = smul.addr %s203, 8
        %s205 = scalar_lea.vmem [#allocation7], %s204
        %v206 = vld [vmem:[%s177] sm:$0xff]
        %v207 = vld [vmem:[%s177 + $0x8] sm:$0xff]
        %v208 = vld [vmem:[%s177 + $0x10] sm:$0xff]
        %v209 = vld [vmem:[#allocation5] sm:$0xff]
        %v210 = vld [vmem:[#allocation5 + $0x8] sm:$0xff]
        %v211 = vld [vmem:[#allocation5 + $0x10] sm:$0xff]
        %v212 = vld [vmem:[#allocation5 + $0x18] sm:$0xff]
        %v213 = vld [vmem:[#allocation5 + $0x20] sm:$0xff]
        %v214 = vld [vmem:[#allocation5 + $0x28] sm:$0xff]
        %v215 = vld [vmem:[#allocation5 + $0x30] sm:$0xff]
        %v216 = vld [vmem:[#allocation5 + $0x38] sm:$0xff]
        %v217 = vld [vmem:[#allocation5 + $0x40] sm:$0xff]
        %v218 = vld [vmem:[#allocation5 + $0x48] sm:$0xff]
        %v219 = vld [vmem:[#allocation5 + $0x50] sm:$0xff]
        %v220 = vld [vmem:[#allocation5 + $0x58] sm:$0xff]
        %v221 = vld [vmem:[#allocation5 + $0x60] sm:$0xff]
        %v222 = vld [vmem:[#allocation5 + $0x68] sm:$0xff]
        %v223 = vld [vmem:[#allocation5 + $0x70] sm:$0xff]
        %v224 = vld [vmem:[#allocation5 + $0x78] sm:$0xff]
        %v225 = vld [vmem:[#allocation5 + $0x80] sm:$0xff]
        %v226 = vld [vmem:[#allocation5 + $0x88] sm:$0xff]
        %v227 = vld [vmem:[#allocation5 + $0x90] sm:$0xff]
        %v228 = vld [vmem:[#allocation5 + $0x98] sm:$0xff]
        %v229 = vld [vmem:[#allocation5 + $0xa0] sm:$0xff]
        %v230 = vld [vmem:[#allocation5 + $0xa8] sm:$0xff]
        %v231 = vld [vmem:[#allocation5 + $0xb0] sm:$0xff]
        %v232 = vld [vmem:[#allocation5 + $0xb8] sm:$0xff]
        %v233 = vld [vmem:[#allocation5 + $0xc0] sm:$0xff]
        %v234 = vld [vmem:[#allocation5 + $0xc8] sm:$0xff]
        %v235 = vld [vmem:[#allocation5 + $0xd0] sm:$0xff]
        %v236 = vld [vmem:[#allocation5 + $0xd8] sm:$0xff]
        %v237 = vld [vmem:[#allocation5 + $0xe0] sm:$0xff]
        %v238 = vld [vmem:[#allocation5 + $0xe8] sm:$0xff]
        %v239 = vld [vmem:[#allocation5 + $0xf0] sm:$0xff]
        %v240 = vld [vmem:[#allocation5 + $0xf8] sm:$0xff]
        %v241 = vld [vmem:[#allocation5 + $0x100] sm:$0xff]
        %v242 = vld [vmem:[#allocation5 + $0x108] sm:$0xff]
        %v243 = vld [vmem:[#allocation5 + $0x110] sm:$0xff]
        %v244 = vld [vmem:[#allocation5 + $0x118] sm:$0xff]
        %v245 = vld [vmem:[#allocation5 + $0x120] sm:$0xff]
        %v246 = vld [vmem:[#allocation5 + $0x128] sm:$0xff]
        %v247 = vld [vmem:[#allocation5 + $0x130] sm:$0xff]
        %v248 = vld [vmem:[#allocation5 + $0x138] sm:$0xff]
        %v249 = vld [vmem:[%s2] sm:$0x1]
        %v251 = vperm.slane %v249, 0
        %vm253 = vcmask 523264
        %v255 = vsel %vm253, %v208, 0
        %v257 = vand.u32 %v224, 4294901760
        %258 = vmatpush.msra.mxu0 %v257
        %v259 = vand.u32 %v223, 4294901760
        %260 = vmatpush.msra.mxu0 %v259
        %v261 = vand.u32 %v222, 4294901760
        %262 = vmatpush.msra.mxu0 %v261
        %v263 = vand.u32 %v221, 4294901760
        %264 = vmatpush.msra.mxu0 %v263
        %v265 = vand.u32 %v220, 4294901760
        %266 = vmatpush.msra.mxu0 %v265
        %v267 = vand.u32 %v219, 4294901760
        %268 = vmatpush.msra.mxu0 %v267
        %v269 = vand.u32 %v218, 4294901760
        %270 = vmatpush.msra.mxu0 %v269
        %v271 = vand.u32 %v217, 4294901760
        %272 = vmatpush.msra.mxu0 %v271
        %v273 = vand.u32 %v216, 4294901760
        %274 = vmatpush.msra.mxu0 %v273
        %v275 = vand.u32 %v215, 4294901760
        %276 = vmatpush.msra.mxu0 %v275
        %v277 = vand.u32 %v214, 4294901760
        %278 = vmatpush.msra.mxu0 %v277
        %v279 = vand.u32 %v213, 4294901760
        %280 = vmatpush.msra.mxu0 %v279
        %v281 = vand.u32 %v212, 4294901760
        %282 = vmatpush.msra.mxu0 %v281
        %v283 = vand.u32 %v211, 4294901760
        %284 = vmatpush.msra.mxu0 %v283
        %v285 = vand.u32 %v210, 4294901760
        %286 = vmatpush.msra.mxu0 %v285
        %v287 = vand.u32 %v209, 4294901760
        %288 = vmatpush.msra.mxu0 %v287
        %v289 = vand.u32 %v206, 4294901760
        %v290 = vsub.f32 %v206, %v289
        %v291 = vand.u32 %v290, 4294901760
        %v292 = vsub.f32 %v290, %v291
        %v293 = vand.u32 %v292, 4294901760
        %294 = vmatmul.f32.gmra.mxu0 %v293
        %v295 = vpop.f32.mrf.mxu0
        %v296 = vadd.f32 %v251, %v295
        %297 = vdwg.mxu0
        %v298 = vand.u32 %v224, 4294901760
        %v299 = vsub.f32 %v224, %v298
        %v300 = vand.u32 %v299, 4294901760
        %v301 = vsub.f32 %v299, %v300
        %v302 = vand.u32 %v301, 4294901760
        %303 = vmatpush.msra.mxu0 %v302
        %v304 = vand.u32 %v223, 4294901760
        %v305 = vsub.f32 %v223, %v304
        %v306 = vand.u32 %v305, 4294901760
        %v307 = vsub.f32 %v305, %v306
        %v308 = vand.u32 %v307, 4294901760
        %309 = vmatpush.msra.mxu0 %v308
        %v310 = vand.u32 %v222, 4294901760
        %v311 = vsub.f32 %v222, %v310
        %v312 = vand.u32 %v311, 4294901760
        %v313 = vsub.f32 %v311, %v312
        %v314 = vand.u32 %v313, 4294901760
        %315 = vmatpush.msra.mxu0 %v314
        %v316 = vand.u32 %v221, 4294901760
        %v317 = vsub.f32 %v221, %v316
        %v318 = vand.u32 %v317, 4294901760
        %v319 = vsub.f32 %v317, %v318
        %v320 = vand.u32 %v319, 4294901760
        %321 = vmatpush.msra.mxu0 %v320
        %v322 = vand.u32 %v220, 4294901760
        %v323 = vsub.f32 %v220, %v322
        %v324 = vand.u32 %v323, 4294901760
        %v325 = vsub.f32 %v323, %v324
        %v326 = vand.u32 %v325, 4294901760
        %327 = vmatpush.msra.mxu0 %v326
        %v328 = vand.u32 %v219, 4294901760
        %v329 = vsub.f32 %v219, %v328
        %v330 = vand.u32 %v329, 4294901760
        %v331 = vsub.f32 %v329, %v330
        %v332 = vand.u32 %v331, 4294901760
        %333 = vmatpush.msra.mxu0 %v332
        %v334 = vand.u32 %v218, 4294901760
        %v335 = vsub.f32 %v218, %v334
        %v336 = vand.u32 %v335, 4294901760
        %v337 = vsub.f32 %v335, %v336
        %v338 = vand.u32 %v337, 4294901760
        %339 = vmatpush.msra.mxu0 %v338
        %v340 = vand.u32 %v217, 4294901760
        %v341 = vsub.f32 %v217, %v340
        %v342 = vand.u32 %v341, 4294901760
        %v343 = vsub.f32 %v341, %v342
        %v344 = vand.u32 %v343, 4294901760
        %345 = vmatpush.msra.mxu0 %v344
        %v346 = vand.u32 %v216, 4294901760
        %v347 = vsub.f32 %v216, %v346
        %v348 = vand.u32 %v347, 4294901760
        %v349 = vsub.f32 %v347, %v348
        %v350 = vand.u32 %v349, 4294901760
        %351 = vmatpush.msra.mxu0 %v350
        %v352 = vand.u32 %v215, 4294901760
        %v353 = vsub.f32 %v215, %v352
        %v354 = vand.u32 %v353, 4294901760
        %v355 = vsub.f32 %v353, %v354
        %v356 = vand.u32 %v355, 4294901760
        %357 = vmatpush.msra.mxu0 %v356
        %v358 = vand.u32 %v214, 4294901760
        %v359 = vsub.f32 %v214, %v358
        %v360 = vand.u32 %v359, 4294901760
        %v361 = vsub.f32 %v359, %v360
        %v362 = vand.u32 %v361, 4294901760
        %363 = vmatpush.msra.mxu0 %v362
        %v364 = vand.u32 %v213, 4294901760
        %v365 = vsub.f32 %v213, %v364
        %v366 = vand.u32 %v365, 4294901760
        %v367 = vsub.f32 %v365, %v366
        %v368 = vand.u32 %v367, 4294901760
        %369 = vmatpush.msra.mxu0 %v368
        %v370 = vand.u32 %v212, 4294901760
        %v371 = vsub.f32 %v212, %v370
        %v372 = vand.u32 %v371, 4294901760
        %v373 = vsub.f32 %v371, %v372
        %v374 = vand.u32 %v373, 4294901760
        %375 = vmatpush.msra.mxu0 %v374
        %v376 = vand.u32 %v211, 4294901760
        %v377 = vsub.f32 %v211, %v376
        %v378 = vand.u32 %v377, 4294901760
        %v379 = vsub.f32 %v377, %v378
        %v380 = vand.u32 %v379, 4294901760
        %381 = vmatpush.msra.mxu0 %v380
        %v382 = vand.u32 %v210, 4294901760
        %v383 = vsub.f32 %v210, %v382
        %v384 = vand.u32 %v383, 4294901760
        %v385 = vsub.f32 %v383, %v384
        %v386 = vand.u32 %v385, 4294901760
        %387 = vmatpush.msra.mxu0 %v386
        %v388 = vand.u32 %v209, 4294901760
        %v389 = vsub.f32 %v209, %v388
        %v390 = vand.u32 %v389, 4294901760
        %v391 = vsub.f32 %v389, %v390
        %v392 = vand.u32 %v391, 4294901760
        %393 = vmatpush.msra.mxu0 %v392
        %v394 = vand.u32 %v206, 4294901760
        %395 = vmatmul.f32.gmra.mxu0 %v394
        %v396 = vpop.f32.mrf.mxu0
        %v397 = vadd.f32 %v296, %v396
        %398 = vdwg.mxu0
        %v399 = vand.u32 %v224, 4294901760
        %v400 = vsub.f32 %v224, %v399
        %401 = vmatpush.msra.mxu0 %v400
        %v402 = vand.u32 %v223, 4294901760
        %v403 = vsub.f32 %v223, %v402
        %404 = vmatpush.msra.mxu0 %v403
        %v405 = vand.u32 %v222, 4294901760
        %v406 = vsub.f32 %v222, %v405
        %407 = vmatpush.msra.mxu0 %v406
        %v408 = vand.u32 %v221, 4294901760
        %v409 = vsub.f32 %v221, %v408
        %410 = vmatpush.msra.mxu0 %v409
        %v411 = vand.u32 %v220, 4294901760
        %v412 = vsub.f32 %v220, %v411
        %413 = vmatpush.msra.mxu0 %v412
        %v414 = vand.u32 %v219, 4294901760
        %v415 = vsub.f32 %v219, %v414
        %416 = vmatpush.msra.mxu0 %v415
        %v417 = vand.u32 %v218, 4294901760
        %v418 = vsub.f32 %v218, %v417
        %419 = vmatpush.msra.mxu0 %v418
        %v420 = vand.u32 %v217, 4294901760
        %v421 = vsub.f32 %v217, %v420
        %422 = vmatpush.msra.mxu0 %v421
        %v423 = vand.u32 %v216, 4294901760
        %v424 = vsub.f32 %v216, %v423
        %425 = vmatpush.msra.mxu0 %v424
        %v426 = vand.u32 %v215, 4294901760
        %v427 = vsub.f32 %v215, %v426
        %428 = vmatpush.msra.mxu0 %v427
        %v429 = vand.u32 %v214, 4294901760
        %v430 = vsub.f32 %v214, %v429
        %431 = vmatpush.msra.mxu0 %v430
        %v432 = vand.u32 %v213, 4294901760
        %v433 = vsub.f32 %v213, %v432
        %434 = vmatpush.msra.mxu0 %v433
        %v435 = vand.u32 %v212, 4294901760
        %v436 = vsub.f32 %v212, %v435
        %437 = vmatpush.msra.mxu0 %v436
        %v438 = vand.u32 %v211, 4294901760
        %v439 = vsub.f32 %v211, %v438
        %440 = vmatpush.msra.mxu0 %v439
        %v441 = vand.u32 %v210, 4294901760
        %v442 = vsub.f32 %v210, %v441
        %443 = vmatpush.msra.mxu0 %v442
        %v444 = vand.u32 %v209, 4294901760
        %v445 = vsub.f32 %v209, %v444
        %446 = vmatpush.msra.mxu0 %v445
        %v447 = vand.u32 %v206, 4294901760
        %v448 = vsub.f32 %v206, %v447
        %449 = vmatmul.f32.gmra.mxu0 %v448
        %v450 = vpop.f32.mrf.mxu0
        %v451 = vadd.f32 %v397, %v450
        %452 = vdwg.mxu0
        %v453 = vand.u32 %v224, 4294901760
        %454 = vmatpush.msra.mxu0 %v453
        %v455 = vand.u32 %v223, 4294901760
        %456 = vmatpush.msra.mxu0 %v455
        %v457 = vand.u32 %v222, 4294901760
        %458 = vmatpush.msra.mxu0 %v457
        %v459 = vand.u32 %v221, 4294901760
        %460 = vmatpush.msra.mxu0 %v459
        %v461 = vand.u32 %v220, 4294901760
        %462 = vmatpush.msra.mxu0 %v461
        %v463 = vand.u32 %v219, 4294901760
        %464 = vmatpush.msra.mxu0 %v463
        %v465 = vand.u32 %v218, 4294901760
        %466 = vmatpush.msra.mxu0 %v465
        %v467 = vand.u32 %v217, 4294901760
        %468 = vmatpush.msra.mxu0 %v467
        %v469 = vand.u32 %v216, 4294901760
        %470 = vmatpush.msra.mxu0 %v469
        %v471 = vand.u32 %v215, 4294901760
        %472 = vmatpush.msra.mxu0 %v471
        %v473 = vand.u32 %v214, 4294901760
        %474 = vmatpush.msra.mxu0 %v473
        %v475 = vand.u32 %v213, 4294901760
        %476 = vmatpush.msra.mxu0 %v475
        %v477 = vand.u32 %v212, 4294901760
        %478 = vmatpush.msra.mxu0 %v477
        %v479 = vand.u32 %v211, 4294901760
        %480 = vmatpush.msra.mxu0 %v479
        %v481 = vand.u32 %v210, 4294901760
        %482 = vmatpush.msra.mxu0 %v481
        %v483 = vand.u32 %v209, 4294901760
        %484 = vmatpush.msra.mxu0 %v483
        %v485 = vand.u32 %v206, 4294901760
        %v486 = vsub.f32 %v206, %v485
        %v487 = vand.u32 %v486, 4294901760
        %488 = vmatmul.f32.gmra.mxu0 %v487
        %v489 = vpop.f32.mrf.mxu0
        %v490 = vadd.f32 %v451, %v489
        %491 = vdwg.mxu0
        %v492 = vand.u32 %v224, 4294901760
        %v493 = vsub.f32 %v224, %v492
        %v494 = vand.u32 %v493, 4294901760
        %495 = vmatpush.msra.mxu0 %v494
        %v496 = vand.u32 %v223, 4294901760
        %v497 = vsub.f32 %v223, %v496
        %v498 = vand.u32 %v497, 4294901760
        %499 = vmatpush.msra.mxu0 %v498
        %v500 = vand.u32 %v222, 4294901760
        %v501 = vsub.f32 %v222, %v500
        %v502 = vand.u32 %v501, 4294901760
        %503 = vmatpush.msra.mxu0 %v502
        %v504 = vand.u32 %v221, 4294901760
        %v505 = vsub.f32 %v221, %v504
        %v506 = vand.u32 %v505, 4294901760
        %507 = vmatpush.msra.mxu0 %v506
        %v508 = vand.u32 %v220, 4294901760
        %v509 = vsub.f32 %v220, %v508
        %v510 = vand.u32 %v509, 4294901760
        %511 = vmatpush.msra.mxu0 %v510
        %v512 = vand.u32 %v219, 4294901760
        %v513 = vsub.f32 %v219, %v512
        %v514 = vand.u32 %v513, 4294901760
        %515 = vmatpush.msra.mxu0 %v514
        %v516 = vand.u32 %v218, 4294901760
        %v517 = vsub.f32 %v218, %v516
        %v518 = vand.u32 %v517, 4294901760
        %519 = vmatpush.msra.mxu0 %v518
        %v520 = vand.u32 %v217, 4294901760
        %v521 = vsub.f32 %v217, %v520
        %v522 = vand.u32 %v521, 4294901760
        %523 = vmatpush.msra.mxu0 %v522
        %v524 = vand.u32 %v216, 4294901760
        %v525 = vsub.f32 %v216, %v524
        %v526 = vand.u32 %v525, 4294901760
        %527 = vmatpush.msra.mxu0 %v526
        %v528 = vand.u32 %v215, 4294901760
        %v529 = vsub.f32 %v215, %v528
        %v530 = vand.u32 %v529, 4294901760
        %531 = vmatpush.msra.mxu0 %v530
        %v532 = vand.u32 %v214, 4294901760
        %v533 = vsub.f32 %v214, %v532
        %v534 = vand.u32 %v533, 4294901760
        %535 = vmatpush.msra.mxu0 %v534
        %v536 = vand.u32 %v213, 4294901760
        %v537 = vsub.f32 %v213, %v536
        %v538 = vand.u32 %v537, 4294901760
        %539 = vmatpush.msra.mxu0 %v538
        %v540 = vand.u32 %v212, 4294901760
        %v541 = vsub.f32 %v212, %v540
        %v542 = vand.u32 %v541, 4294901760
        %543 = vmatpush.msra.mxu0 %v542
        %v544 = vand.u32 %v211, 4294901760
        %v545 = vsub.f32 %v211, %v544
        %v546 = vand.u32 %v545, 4294901760
        %547 = vmatpush.msra.mxu0 %v546
        %v548 = vand.u32 %v210, 4294901760
        %v549 = vsub.f32 %v210, %v548
        %v550 = vand.u32 %v549, 4294901760
        %551 = vmatpush.msra.mxu0 %v550
        %v552 = vand.u32 %v209, 4294901760
        %v553 = vsub.f32 %v209, %v552
        %v554 = vand.u32 %v553, 4294901760
        %555 = vmatpush.msra.mxu0 %v554
        %v556 = vand.u32 %v206, 4294901760
        %557 = vmatmul.f32.gmra.mxu0 %v556
        %v558 = vpop.f32.mrf.mxu0
        %v559 = vadd.f32 %v490, %v558
        %560 = vdwg.mxu0
        %v561 = vand.u32 %v224, 4294901760
        %562 = vmatpush.msra.mxu0 %v561
        %v563 = vand.u32 %v223, 4294901760
        %564 = vmatpush.msra.mxu0 %v563
        %v565 = vand.u32 %v222, 4294901760
        %566 = vmatpush.msra.mxu0 %v565
        %v567 = vand.u32 %v221, 4294901760
        %568 = vmatpush.msra.mxu0 %v567
        %v569 = vand.u32 %v220, 4294901760
        %570 = vmatpush.msra.mxu0 %v569
        %v571 = vand.u32 %v219, 4294901760
        %572 = vmatpush.msra.mxu0 %v571
        %v573 = vand.u32 %v218, 4294901760
        %574 = vmatpush.msra.mxu0 %v573
        %v575 = vand.u32 %v217, 4294901760
        %576 = vmatpush.msra.mxu0 %v575
        %v577 = vand.u32 %v216, 4294901760
        %578 = vmatpush.msra.mxu0 %v577
        %v579 = vand.u32 %v215, 4294901760
        %580 = vmatpush.msra.mxu0 %v579
        %v581 = vand.u32 %v214, 4294901760
        %582 = vmatpush.msra.mxu0 %v581
        %v583 = vand.u32 %v213, 4294901760
        %584 = vmatpush.msra.mxu0 %v583
        %v585 = vand.u32 %v212, 4294901760
        %586 = vmatpush.msra.mxu0 %v585
        %v587 = vand.u32 %v211, 4294901760
        %588 = vmatpush.msra.mxu0 %v587
        %v589 = vand.u32 %v210, 4294901760
        %590 = vmatpush.msra.mxu0 %v589
        %v591 = vand.u32 %v209, 4294901760
        %592 = vmatpush.msra.mxu0 %v591
        %v593 = vand.u32 %v206, 4294901760
        %594 = vmatmul.f32.gmra.mxu0 %v593
        %v595 = vpop.f32.mrf.mxu0
        %v596 = vadd.f32 %v559, %v595
        %597 = vdwg.mxu0
        %v598 = vand.u32 %v240, 4294901760
        %599 = vmatpush.msra.mxu0 %v598
        %v600 = vand.u32 %v239, 4294901760
        %601 = vmatpush.msra.mxu0 %v600
        %v602 = vand.u32 %v238, 4294901760
        %603 = vmatpush.msra.mxu0 %v602
        %v604 = vand.u32 %v237, 4294901760
        %605 = vmatpush.msra.mxu0 %v604
        %v606 = vand.u32 %v236, 4294901760
        %607 = vmatpush.msra.mxu0 %v606
        %v608 = vand.u32 %v235, 4294901760
        %609 = vmatpush.msra.mxu0 %v608
        %v610 = vand.u32 %v234, 4294901760
        %611 = vmatpush.msra.mxu0 %v610
        %v612 = vand.u32 %v233, 4294901760
        %613 = vmatpush.msra.mxu0 %v612
        %v614 = vand.u32 %v232, 4294901760
        %615 = vmatpush.msra.mxu0 %v614
        %v616 = vand.u32 %v231, 4294901760
        %617 = vmatpush.msra.mxu0 %v616
        %v618 = vand.u32 %v230, 4294901760
        %619 = vmatpush.msra.mxu0 %v618
        %v620 = vand.u32 %v229, 4294901760
        %621 = vmatpush.msra.mxu0 %v620
        %v622 = vand.u32 %v228, 4294901760
        %623 = vmatpush.msra.mxu0 %v622
        %v624 = vand.u32 %v227, 4294901760
        %625 = vmatpush.msra.mxu0 %v624
        %v626 = vand.u32 %v226, 4294901760
        %627 = vmatpush.msra.mxu0 %v626
        %v628 = vand.u32 %v225, 4294901760
        %629 = vmatpush.msra.mxu0 %v628
        %v630 = vand.u32 %v207, 4294901760
        %v631 = vsub.f32 %v207, %v630
        %v632 = vand.u32 %v631, 4294901760
        %v633 = vsub.f32 %v631, %v632
        %v634 = vand.u32 %v633, 4294901760
        %635 = vmatmul.f32.gmra.mxu0 %v634
        %v636 = vpop.f32.mrf.mxu0
        %v637 = vadd.f32 %v596, %v636
        %638 = vdwg.mxu0
        %v639 = vand.u32 %v240, 4294901760
        %v640 = vsub.f32 %v240, %v639
        %v641 = vand.u32 %v640, 4294901760
        %v642 = vsub.f32 %v640, %v641
        %v643 = vand.u32 %v642, 4294901760
        %644 = vmatpush.msra.mxu0 %v643
        %v645 = vand.u32 %v239, 4294901760
        %v646 = vsub.f32 %v239, %v645
        %v647 = vand.u32 %v646, 4294901760
        %v648 = vsub.f32 %v646, %v647
        %v649 = vand.u32 %v648, 4294901760
        %650 = vmatpush.msra.mxu0 %v649
        %v651 = vand.u32 %v238, 4294901760
        %v652 = vsub.f32 %v238, %v651
        %v653 = vand.u32 %v652, 4294901760
        %v654 = vsub.f32 %v652, %v653
        %v655 = vand.u32 %v654, 4294901760
        %656 = vmatpush.msra.mxu0 %v655
        %v657 = vand.u32 %v237, 4294901760
        %v658 = vsub.f32 %v237, %v657
        %v659 = vand.u32 %v658, 4294901760
        %v660 = vsub.f32 %v658, %v659
        %v661 = vand.u32 %v660, 4294901760
        %662 = vmatpush.msra.mxu0 %v661
        %v663 = vand.u32 %v236, 4294901760
        %v664 = vsub.f32 %v236, %v663
        %v665 = vand.u32 %v664, 4294901760
        %v666 = vsub.f32 %v664, %v665
        %v667 = vand.u32 %v666, 4294901760
        %668 = vmatpush.msra.mxu0 %v667
        %v669 = vand.u32 %v235, 4294901760
        %v670 = vsub.f32 %v235, %v669
        %v671 = vand.u32 %v670, 4294901760
        %v672 = vsub.f32 %v670, %v671
        %v673 = vand.u32 %v672, 4294901760
        %674 = vmatpush.msra.mxu0 %v673
        %v675 = vand.u32 %v234, 4294901760
        %v676 = vsub.f32 %v234, %v675
        %v677 = vand.u32 %v676, 4294901760
        %v678 = vsub.f32 %v676, %v677
        %v679 = vand.u32 %v678, 4294901760
        %680 = vmatpush.msra.mxu0 %v679
        %v681 = vand.u32 %v233, 4294901760
        %v682 = vsub.f32 %v233, %v681
        %v683 = vand.u32 %v682, 4294901760
        %v684 = vsub.f32 %v682, %v683
        %v685 = vand.u32 %v684, 4294901760
        %686 = vmatpush.msra.mxu0 %v685
        %v687 = vand.u32 %v232, 4294901760
        %v688 = vsub.f32 %v232, %v687
        %v689 = vand.u32 %v688, 4294901760
        %v690 = vsub.f32 %v688, %v689
        %v691 = vand.u32 %v690, 4294901760
        %692 = vmatpush.msra.mxu0 %v691
        %v693 = vand.u32 %v231, 4294901760
        %v694 = vsub.f32 %v231, %v693
        %v695 = vand.u32 %v694, 4294901760
        %v696 = vsub.f32 %v694, %v695
        %v697 = vand.u32 %v696, 4294901760
        %698 = vmatpush.msra.mxu0 %v697
        %v699 = vand.u32 %v230, 4294901760
        %v700 = vsub.f32 %v230, %v699
        %v701 = vand.u32 %v700, 4294901760
        %v702 = vsub.f32 %v700, %v701
        %v703 = vand.u32 %v702, 4294901760
        %704 = vmatpush.msra.mxu0 %v703
        %v705 = vand.u32 %v229, 4294901760
        %v706 = vsub.f32 %v229, %v705
        %v707 = vand.u32 %v706, 4294901760
        %v708 = vsub.f32 %v706, %v707
        %v709 = vand.u32 %v708, 4294901760
        %710 = vmatpush.msra.mxu0 %v709
        %v711 = vand.u32 %v228, 4294901760
        %v712 = vsub.f32 %v228, %v711
        %v713 = vand.u32 %v712, 4294901760
        %v714 = vsub.f32 %v712, %v713
        %v715 = vand.u32 %v714, 4294901760
        %716 = vmatpush.msra.mxu0 %v715
        %v717 = vand.u32 %v227, 4294901760
        %v718 = vsub.f32 %v227, %v717
        %v719 = vand.u32 %v718, 4294901760
        %v720 = vsub.f32 %v718, %v719
        %v721 = vand.u32 %v720, 4294901760
        %722 = vmatpush.msra.mxu0 %v721
        %v723 = vand.u32 %v226, 4294901760
        %v724 = vsub.f32 %v226, %v723
        %v725 = vand.u32 %v724, 4294901760
        %v726 = vsub.f32 %v724, %v725
        %v727 = vand.u32 %v726, 4294901760
        %728 = vmatpush.msra.mxu0 %v727
        %v729 = vand.u32 %v225, 4294901760
        %v730 = vsub.f32 %v225, %v729
        %v731 = vand.u32 %v730, 4294901760
        %v732 = vsub.f32 %v730, %v731
        %v733 = vand.u32 %v732, 4294901760
        %734 = vmatpush.msra.mxu0 %v733
        %v735 = vand.u32 %v207, 4294901760
        %736 = vmatmul.f32.gmra.mxu0 %v735
        %v737 = vpop.f32.mrf.mxu0
        %v738 = vadd.f32 %v637, %v737
        %739 = vdwg.mxu0
        %v740 = vand.u32 %v240, 4294901760
        %v741 = vsub.f32 %v240, %v740
        %742 = vmatpush.msra.mxu0 %v741
        %v743 = vand.u32 %v239, 4294901760
        %v744 = vsub.f32 %v239, %v743
        %745 = vmatpush.msra.mxu0 %v744
        %v746 = vand.u32 %v238, 4294901760
        %v747 = vsub.f32 %v238, %v746
        %748 = vmatpush.msra.mxu0 %v747
        %v749 = vand.u32 %v237, 4294901760
        %v750 = vsub.f32 %v237, %v749
        %751 = vmatpush.msra.mxu0 %v750
        %v752 = vand.u32 %v236, 4294901760
        %v753 = vsub.f32 %v236, %v752
        %754 = vmatpush.msra.mxu0 %v753
        %v755 = vand.u32 %v235, 4294901760
        %v756 = vsub.f32 %v235, %v755
        %757 = vmatpush.msra.mxu0 %v756
        %v758 = vand.u32 %v234, 4294901760
        %v759 = vsub.f32 %v234, %v758
        %760 = vmatpush.msra.mxu0 %v759
        %v761 = vand.u32 %v233, 4294901760
        %v762 = vsub.f32 %v233, %v761
        %763 = vmatpush.msra.mxu0 %v762
        %v764 = vand.u32 %v232, 4294901760
        %v765 = vsub.f32 %v232, %v764
        %766 = vmatpush.msra.mxu0 %v765
        %v767 = vand.u32 %v231, 4294901760
        %v768 = vsub.f32 %v231, %v767
        %769 = vmatpush.msra.mxu0 %v768
        %v770 = vand.u32 %v230, 4294901760
        %v771 = vsub.f32 %v230, %v770
        %772 = vmatpush.msra.mxu0 %v771
        %v773 = vand.u32 %v229, 4294901760
        %v774 = vsub.f32 %v229, %v773
        %775 = vmatpush.msra.mxu0 %v774
        %v776 = vand.u32 %v228, 4294901760
        %v777 = vsub.f32 %v228, %v776
        %778 = vmatpush.msra.mxu0 %v777
        %v779 = vand.u32 %v227, 4294901760
        %v780 = vsub.f32 %v227, %v779
        %781 = vmatpush.msra.mxu0 %v780
        %v782 = vand.u32 %v226, 4294901760
        %v783 = vsub.f32 %v226, %v782
        %784 = vmatpush.msra.mxu0 %v783
        %v785 = vand.u32 %v225, 4294901760
        %v786 = vsub.f32 %v225, %v785
        %787 = vmatpush.msra.mxu0 %v786
        %v788 = vand.u32 %v207, 4294901760
        %v789 = vsub.f32 %v207, %v788
        %790 = vmatmul.f32.gmra.mxu0 %v789
        %v791 = vpop.f32.mrf.mxu0
        %v792 = vadd.f32 %v738, %v791
        %793 = vdwg.mxu0
        %v794 = vand.u32 %v240, 4294901760
        %795 = vmatpush.msra.mxu0 %v794
        %v796 = vand.u32 %v239, 4294901760
        %797 = vmatpush.msra.mxu0 %v796
        %v798 = vand.u32 %v238, 4294901760
        %799 = vmatpush.msra.mxu0 %v798
        %v800 = vand.u32 %v237, 4294901760
        %801 = vmatpush.msra.mxu0 %v800
        %v802 = vand.u32 %v236, 4294901760
        %803 = vmatpush.msra.mxu0 %v802
        %v804 = vand.u32 %v235, 4294901760
        %805 = vmatpush.msra.mxu0 %v804
        %v806 = vand.u32 %v234, 4294901760
        %807 = vmatpush.msra.mxu0 %v806
        %v808 = vand.u32 %v233, 4294901760
        %809 = vmatpush.msra.mxu0 %v808
        %v810 = vand.u32 %v232, 4294901760
        %811 = vmatpush.msra.mxu0 %v810
        %v812 = vand.u32 %v231, 4294901760
        %813 = vmatpush.msra.mxu0 %v812
        %v814 = vand.u32 %v230, 4294901760
        %815 = vmatpush.msra.mxu0 %v814
        %v816 = vand.u32 %v229, 4294901760
        %817 = vmatpush.msra.mxu0 %v816
        %v818 = vand.u32 %v228, 4294901760
        %819 = vmatpush.msra.mxu0 %v818
        %v820 = vand.u32 %v227, 4294901760
        %821 = vmatpush.msra.mxu0 %v820
        %v822 = vand.u32 %v226, 4294901760
        %823 = vmatpush.msra.mxu0 %v822
        %v824 = vand.u32 %v225, 4294901760
        %825 = vmatpush.msra.mxu0 %v824
        %v826 = vand.u32 %v207, 4294901760
        %v827 = vsub.f32 %v207, %v826
        %v828 = vand.u32 %v827, 4294901760
        %829 = vmatmul.f32.gmra.mxu0 %v828
        %v830 = vpop.f32.mrf.mxu0
        %v831 = vadd.f32 %v792, %v830
        %832 = vdwg.mxu0
        %v833 = vand.u32 %v240, 4294901760
        %v834 = vsub.f32 %v240, %v833
        %v835 = vand.u32 %v834, 4294901760
        %836 = vmatpush.msra.mxu0 %v835
        %v837 = vand.u32 %v239, 4294901760
        %v838 = vsub.f32 %v239, %v837
        %v839 = vand.u32 %v838, 4294901760
        %840 = vmatpush.msra.mxu0 %v839
        %v841 = vand.u32 %v238, 4294901760
        %v842 = vsub.f32 %v238, %v841
        %v843 = vand.u32 %v842, 4294901760
        %844 = vmatpush.msra.mxu0 %v843
        %v845 = vand.u32 %v237, 4294901760
        %v846 = vsub.f32 %v237, %v845
        %v847 = vand.u32 %v846, 4294901760
        %848 = vmatpush.msra.mxu0 %v847
        %v849 = vand.u32 %v236, 4294901760
        %v850 = vsub.f32 %v236, %v849
        %v851 = vand.u32 %v850, 4294901760
        %852 = vmatpush.msra.mxu0 %v851
        %v853 = vand.u32 %v235, 4294901760
        %v854 = vsub.f32 %v235, %v853
        %v855 = vand.u32 %v854, 4294901760
        %856 = vmatpush.msra.mxu0 %v855
        %v857 = vand.u32 %v234, 4294901760
        %v858 = vsub.f32 %v234, %v857
        %v859 = vand.u32 %v858, 4294901760
        %860 = vmatpush.msra.mxu0 %v859
        %v861 = vand.u32 %v233, 4294901760
        %v862 = vsub.f32 %v233, %v861
        %v863 = vand.u32 %v862, 4294901760
        %864 = vmatpush.msra.mxu0 %v863
        %v865 = vand.u32 %v232, 4294901760
        %v866 = vsub.f32 %v232, %v865
        %v867 = vand.u32 %v866, 4294901760
        %868 = vmatpush.msra.mxu0 %v867
        %v869 = vand.u32 %v231, 4294901760
        %v870 = vsub.f32 %v231, %v869
        %v871 = vand.u32 %v870, 4294901760
        %872 = vmatpush.msra.mxu0 %v871
        %v873 = vand.u32 %v230, 4294901760
        %v874 = vsub.f32 %v230, %v873
        %v875 = vand.u32 %v874, 4294901760
        %876 = vmatpush.msra.mxu0 %v875
        %v877 = vand.u32 %v229, 4294901760
        %v878 = vsub.f32 %v229, %v877
        %v879 = vand.u32 %v878, 4294901760
        %880 = vmatpush.msra.mxu0 %v879
        %v881 = vand.u32 %v228, 4294901760
        %v882 = vsub.f32 %v228, %v881
        %v883 = vand.u32 %v882, 4294901760
        %884 = vmatpush.msra.mxu0 %v883
        %v885 = vand.u32 %v227, 4294901760
        %v886 = vsub.f32 %v227, %v885
        %v887 = vand.u32 %v886, 4294901760
        %888 = vmatpush.msra.mxu0 %v887
        %v889 = vand.u32 %v226, 4294901760
        %v890 = vsub.f32 %v226, %v889
        %v891 = vand.u32 %v890, 4294901760
        %892 = vmatpush.msra.mxu0 %v891
        %v893 = vand.u32 %v225, 4294901760
        %v894 = vsub.f32 %v225, %v893
        %v895 = vand.u32 %v894, 4294901760
        %896 = vmatpush.msra.mxu0 %v895
        %v897 = vand.u32 %v207, 4294901760
        %898 = vmatmul.f32.gmra.mxu0 %v897
        %v899 = vpop.f32.mrf.mxu0
        %v900 = vadd.f32 %v831, %v899
        %901 = vdwg.mxu0
        %v902 = vand.u32 %v240, 4294901760
        %903 = vmatpush.msra.mxu0 %v902
        %v904 = vand.u32 %v239, 4294901760
        %905 = vmatpush.msra.mxu0 %v904
        %v906 = vand.u32 %v238, 4294901760
        %907 = vmatpush.msra.mxu0 %v906
        %v908 = vand.u32 %v237, 4294901760
        %909 = vmatpush.msra.mxu0 %v908
        %v910 = vand.u32 %v236, 4294901760
        %911 = vmatpush.msra.mxu0 %v910
        %v912 = vand.u32 %v235, 4294901760
        %913 = vmatpush.msra.mxu0 %v912
        %v914 = vand.u32 %v234, 4294901760
        %915 = vmatpush.msra.mxu0 %v914
        %v916 = vand.u32 %v233, 4294901760
        %917 = vmatpush.msra.mxu0 %v916
        %v918 = vand.u32 %v232, 4294901760
        %919 = vmatpush.msra.mxu0 %v918
        %v920 = vand.u32 %v231, 4294901760
        %921 = vmatpush.msra.mxu0 %v920
        %v922 = vand.u32 %v230, 4294901760
        %923 = vmatpush.msra.mxu0 %v922
        %v924 = vand.u32 %v229, 4294901760
        %925 = vmatpush.msra.mxu0 %v924
        %v926 = vand.u32 %v228, 4294901760
        %927 = vmatpush.msra.mxu0 %v926
        %v928 = vand.u32 %v227, 4294901760
        %929 = vmatpush.msra.mxu0 %v928
        %v930 = vand.u32 %v226, 4294901760
        %931 = vmatpush.msra.mxu0 %v930
        %v932 = vand.u32 %v225, 4294901760
        %933 = vmatpush.msra.mxu0 %v932
        %v934 = vand.u32 %v207, 4294901760
        %935 = vmatmul.f32.gmra.mxu0 %v934
        %v936 = vpop.f32.mrf.mxu0
        %v937 = vadd.f32 %v900, %v936
        %938 = vdwg.mxu0
        %939 = vmatpush.msra.mxu0 0.0
        %940 = vmatpush.msra.mxu0 0.0
        %941 = vmatpush.msra.mxu0 0.0
        %942 = vmatpush.msra.mxu0 0.0
        %943 = vmatpush.msra.mxu0 0.0
        %944 = vmatpush.msra.mxu0 0.0
        %945 = vmatpush.msra.mxu0 0.0
        %946 = vmatpush.msra.mxu0 0.0
        %v947 = vand.u32 %v248, 4294901760
        %948 = vmatpush.msra.mxu0 %v947
        %v949 = vand.u32 %v247, 4294901760
        %950 = vmatpush.msra.mxu0 %v949
        %v951 = vand.u32 %v246, 4294901760
        %952 = vmatpush.msra.mxu0 %v951
        %v953 = vand.u32 %v245, 4294901760
        %954 = vmatpush.msra.mxu0 %v953
        %v955 = vand.u32 %v244, 4294901760
        %956 = vmatpush.msra.mxu0 %v955
        %v957 = vand.u32 %v243, 4294901760
        %958 = vmatpush.msra.mxu0 %v957
        %v959 = vand.u32 %v242, 4294901760
        %960 = vmatpush.msra.mxu0 %v959
        %v961 = vand.u32 %v241, 4294901760
        %962 = vmatpush.msra.mxu0 %v961
        %v963 = vand.u32 %v255, 4294901760
        %v964 = vsub.f32 %v255, %v963
        %v965 = vand.u32 %v964, 4294901760
        %v966 = vsub.f32 %v964, %v965
        %v967 = vand.u32 %v966, 4294901760
        %968 = vmatmul.f32.gmra.mxu0 %v967
        %v969 = vpop.f32.mrf.mxu0
        %v970 = vadd.f32 %v937, %v969
        %971 = vdwg.mxu0
        %972 = vmatpush.msra.mxu0 0.0
        %973 = vmatpush.msra.mxu0 0.0
        %974 = vmatpush.msra.mxu0 0.0
        %975 = vmatpush.msra.mxu0 0.0
        %976 = vmatpush.msra.mxu0 0.0
        %977 = vmatpush.msra.mxu0 0.0
        %978 = vmatpush.msra.mxu0 0.0
        %979 = vmatpush.msra.mxu0 0.0
        %v980 = vand.u32 %v248, 4294901760
        %v981 = vsub.f32 %v248, %v980
        %v982 = vand.u32 %v981, 4294901760
        %v983 = vsub.f32 %v981, %v982
        %v984 = vand.u32 %v983, 4294901760
        %985 = vmatpush.msra.mxu0 %v984
        %v986 = vand.u32 %v247, 4294901760
        %v987 = vsub.f32 %v247, %v986
        %v988 = vand.u32 %v987, 4294901760
        %v989 = vsub.f32 %v987, %v988
        %v990 = vand.u32 %v989, 4294901760
        %991 = vmatpush.msra.mxu0 %v990
        %v992 = vand.u32 %v246, 4294901760
        %v993 = vsub.f32 %v246, %v992
        %v994 = vand.u32 %v993, 4294901760
        %v995 = vsub.f32 %v993, %v994
        %v996 = vand.u32 %v995, 4294901760
        %997 = vmatpush.msra.mxu0 %v996
        %v998 = vand.u32 %v245, 4294901760
        %v999 = vsub.f32 %v245, %v998
        %v1000 = vand.u32 %v999, 4294901760
        %v1001 = vsub.f32 %v999, %v1000
        %v1002 = vand.u32 %v1001, 4294901760
        %1003 = vmatpush.msra.mxu0 %v1002
        %v1004 = vand.u32 %v244, 4294901760
        %v1005 = vsub.f32 %v244, %v1004
        %v1006 = vand.u32 %v1005, 4294901760
        %v1007 = vsub.f32 %v1005, %v1006
        %v1008 = vand.u32 %v1007, 4294901760
        %1009 = vmatpush.msra.mxu0 %v1008
        %v1010 = vand.u32 %v243, 4294901760
        %v1011 = vsub.f32 %v243, %v1010
        %v1012 = vand.u32 %v1011, 4294901760
        %v1013 = vsub.f32 %v1011, %v1012
        %v1014 = vand.u32 %v1013, 4294901760
        %1015 = vmatpush.msra.mxu0 %v1014
        %v1016 = vand.u32 %v242, 4294901760
        %v1017 = vsub.f32 %v242, %v1016
        %v1018 = vand.u32 %v1017, 4294901760
        %v1019 = vsub.f32 %v1017, %v1018
        %v1020 = vand.u32 %v1019, 4294901760
        %1021 = vmatpush.msra.mxu0 %v1020
        %v1022 = vand.u32 %v241, 4294901760
        %v1023 = vsub.f32 %v241, %v1022
        %v1024 = vand.u32 %v1023, 4294901760
        %v1025 = vsub.f32 %v1023, %v1024
        %v1026 = vand.u32 %v1025, 4294901760
        %1027 = vmatpush.msra.mxu0 %v1026
        %v1028 = vand.u32 %v255, 4294901760
        %1029 = vmatmul.f32.gmra.mxu0 %v1028
        %v1030 = vpop.f32.mrf.mxu0
        %v1031 = vadd.f32 %v970, %v1030
        %1032 = vdwg.mxu0
        %1033 = vmatpush.msra.mxu0 0.0
        %1034 = vmatpush.msra.mxu0 0.0
        %1035 = vmatpush.msra.mxu0 0.0
        %1036 = vmatpush.msra.mxu0 0.0
        %1037 = vmatpush.msra.mxu0 0.0
        %1038 = vmatpush.msra.mxu0 0.0
        %1039 = vmatpush.msra.mxu0 0.0
        %1040 = vmatpush.msra.mxu0 0.0
        %v1041 = vand.u32 %v248, 4294901760
        %v1042 = vsub.f32 %v248, %v1041
        %1043 = vmatpush.msra.mxu0 %v1042
        %v1044 = vand.u32 %v247, 4294901760
        %v1045 = vsub.f32 %v247, %v1044
        %1046 = vmatpush.msra.mxu0 %v1045
        %v1047 = vand.u32 %v246, 4294901760
        %v1048 = vsub.f32 %v246, %v1047
        %1049 = vmatpush.msra.mxu0 %v1048
        %v1050 = vand.u32 %v245, 4294901760
        %v1051 = vsub.f32 %v245, %v1050
        %1052 = vmatpush.msra.mxu0 %v1051
        %v1053 = vand.u32 %v244, 4294901760
        %v1054 = vsub.f32 %v244, %v1053
        %1055 = vmatpush.msra.mxu0 %v1054
        %v1056 = vand.u32 %v243, 4294901760
        %v1057 = vsub.f32 %v243, %v1056
        %1058 = vmatpush.msra.mxu0 %v1057
        %v1059 = vand.u32 %v242, 4294901760
        %v1060 = vsub.f32 %v242, %v1059
        %1061 = vmatpush.msra.mxu0 %v1060
        %v1062 = vand.u32 %v241, 4294901760
        %v1063 = vsub.f32 %v241, %v1062
        %1064 = vmatpush.msra.mxu0 %v1063
        %v1065 = vand.u32 %v255, 4294901760
        %v1066 = vsub.f32 %v255, %v1065
        %1067 = vmatmul.f32.gmra.mxu0 %v1066
        %v1068 = vpop.f32.mrf.mxu0
        %v1069 = vadd.f32 %v1031, %v1068
        %1070 = vdwg.mxu0
        %1071 = vmatpush.msra.mxu0 0.0
        %1072 = vmatpush.msra.mxu0 0.0
        %1073 = vmatpush.msra.mxu0 0.0
        %1074 = vmatpush.msra.mxu0 0.0
        %1075 = vmatpush.msra.mxu0 0.0
        %1076 = vmatpush.msra.mxu0 0.0
        %1077 = vmatpush.msra.mxu0 0.0
        %1078 = vmatpush.msra.mxu0 0.0
        %v1079 = vand.u32 %v248, 4294901760
        %1080 = vmatpush.msra.mxu0 %v1079
        %v1081 = vand.u32 %v247, 4294901760
        %1082 = vmatpush.msra.mxu0 %v1081
        %v1083 = vand.u32 %v246, 4294901760
        %1084 = vmatpush.msra.mxu0 %v1083
        %v1085 = vand.u32 %v245, 4294901760
        %1086 = vmatpush.msra.mxu0 %v1085
        %v1087 = vand.u32 %v244, 4294901760
        %1088 = vmatpush.msra.mxu0 %v1087
        %v1089 = vand.u32 %v243, 4294901760
        %1090 = vmatpush.msra.mxu0 %v1089
        %v1091 = vand.u32 %v242, 4294901760
        %1092 = vmatpush.msra.mxu0 %v1091
        %v1093 = vand.u32 %v241, 4294901760
        %1094 = vmatpush.msra.mxu0 %v1093
        %v1095 = vand.u32 %v255, 4294901760
        %v1096 = vsub.f32 %v255, %v1095
        %v1097 = vand.u32 %v1096, 4294901760
        %1098 = vmatmul.f32.gmra.mxu0 %v1097
        %v1099 = vpop.f32.mrf.mxu0
        %v1100 = vadd.f32 %v1069, %v1099
        %1101 = vdwg.mxu0
        %1102 = vmatpush.msra.mxu0 0.0
        %1103 = vmatpush.msra.mxu0 0.0
        %1104 = vmatpush.msra.mxu0 0.0
        %1105 = vmatpush.msra.mxu0 0.0
        %1106 = vmatpush.msra.mxu0 0.0
        %1107 = vmatpush.msra.mxu0 0.0
        %1108 = vmatpush.msra.mxu0 0.0
        %1109 = vmatpush.msra.mxu0 0.0
        %v1110 = vand.u32 %v248, 4294901760
        %v1111 = vsub.f32 %v248, %v1110
        %v1112 = vand.u32 %v1111, 4294901760
        %1113 = vmatpush.msra.mxu0 %v1112
        %v1114 = vand.u32 %v247, 4294901760
        %v1115 = vsub.f32 %v247, %v1114
        %v1116 = vand.u32 %v1115, 4294901760
        %1117 = vmatpush.msra.mxu0 %v1116
        %v1118 = vand.u32 %v246, 4294901760
        %v1119 = vsub.f32 %v246, %v1118
        %v1120 = vand.u32 %v1119, 4294901760
        %1121 = vmatpush.msra.mxu0 %v1120
        %v1122 = vand.u32 %v245, 4294901760
        %v1123 = vsub.f32 %v245, %v1122
        %v1124 = vand.u32 %v1123, 4294901760
        %1125 = vmatpush.msra.mxu0 %v1124
        %v1126 = vand.u32 %v244, 4294901760
        %v1127 = vsub.f32 %v244, %v1126
        %v1128 = vand.u32 %v1127, 4294901760
        %1129 = vmatpush.msra.mxu0 %v1128
        %v1130 = vand.u32 %v243, 4294901760
        %v1131 = vsub.f32 %v243, %v1130
        %v1132 = vand.u32 %v1131, 4294901760
        %1133 = vmatpush.msra.mxu0 %v1132
        %v1134 = vand.u32 %v242, 4294901760
        %v1135 = vsub.f32 %v242, %v1134
        %v1136 = vand.u32 %v1135, 4294901760
        %1137 = vmatpush.msra.mxu0 %v1136
        %v1138 = vand.u32 %v241, 4294901760
        %v1139 = vsub.f32 %v241, %v1138
        %v1140 = vand.u32 %v1139, 4294901760
        %1141 = vmatpush.msra.mxu0 %v1140
        %v1142 = vand.u32 %v255, 4294901760
        %1143 = vmatmul.f32.gmra.mxu0 %v1142
        %v1144 = vpop.f32.mrf.mxu0
        %v1145 = vadd.f32 %v1100, %v1144
        %1146 = vdwg.mxu0
        %1147 = vmatpush.msra.mxu0 0.0
        %1148 = vmatpush.msra.mxu0 0.0
        %1149 = vmatpush.msra.mxu0 0.0
        %1150 = vmatpush.msra.mxu0 0.0
        %1151 = vmatpush.msra.mxu0 0.0
        %1152 = vmatpush.msra.mxu0 0.0
        %1153 = vmatpush.msra.mxu0 0.0
        %1154 = vmatpush.msra.mxu0 0.0
        %v1155 = vand.u32 %v248, 4294901760
        %1156 = vmatpush.msra.mxu0 %v1155
        %v1157 = vand.u32 %v247, 4294901760
        %1158 = vmatpush.msra.mxu0 %v1157
        %v1159 = vand.u32 %v246, 4294901760
        %1160 = vmatpush.msra.mxu0 %v1159
        %v1161 = vand.u32 %v245, 4294901760
        %1162 = vmatpush.msra.mxu0 %v1161
        %v1163 = vand.u32 %v244, 4294901760
        %1164 = vmatpush.msra.mxu0 %v1163
        %v1165 = vand.u32 %v243, 4294901760
        %1166 = vmatpush.msra.mxu0 %v1165
        %v1167 = vand.u32 %v242, 4294901760
        %1168 = vmatpush.msra.mxu0 %v1167
        %v1169 = vand.u32 %v241, 4294901760
        %1170 = vmatpush.msra.mxu0 %v1169
        %v1171 = vand.u32 %v255, 4294901760
        %1172 = vmatmul.f32.gmra.mxu0 %v1171
        %v1173 = vpop.f32.mrf.mxu0
        %v1174 = vadd.f32 %v1145, %v1173
        %1175 = vdwg.mxu0
        %1176 = vst [vmem:[%s205] sm:$0xff] %v1174
        %s1177 = sand.u32 %s97, 1
        %s1178 = scalar_lea.sflag [#allocation4], %s1177
        %s1179 = sand.u32 %s97, 1
        %s1180 = smul.addr %s1179, 8
        %s1181 = scalar_lea.vmem [#allocation7], %s1180
        // Predicated region
        $region41: #{mlp_forward_padded.1} parent=31 // pred_check
          %p1182 = pneg %p107
        $region42: #{mlp_forward_padded.1} parent=31 // pred_check_branch
          %1184 = sbr.rel (%p1182) target = $region44
        $region43: #{mlp_forward_padded.1} parent=31 // pred_region
          %1186 = vsyncadd %s1178, 0
          %s1187 = smul.addr %s21, 8
          %s1188 = scalar_lea.hbm %s3, %s1187
          %s1190 = sshll.u32 %s1181, 4
          %s1191 = int_to_ptr.vmem [resolvable:$true] %s1190
          %s1192 = sshll.u32 %s1188, 4
          %s1193 = int_to_ptr.hbm [resolvable:$true] %s1192
          %1195 = dma.vmem_to_hbm [thread:$0]  %s1191, 128, %s1193, %s1178
        $region44: #{mlp_forward_padded.1} parent=31 // pred_fallthru
          _
      $region32: #{mlp_forward_padded.1} parent=5 // pred_fallthru
        _
      %p1196 = scmp.le.s32.totalorder 2, %s16
      // Predicated region
      $region45: #{mlp_forward_padded.1} parent=5 // pred_check
        %p1197 = pneg %p1196
      $region46: #{mlp_forward_padded.1} parent=5 // pred_check_branch
        %1199 = sbr.rel (%p1197) target = $region48
      $region47: #{mlp_forward_padded.1} parent=5 // pred_region
        %s1200 = ssub.s32 %s16, 2
        // Predicated region
        $region49: #{mlp_forward_padded.1} parent=47 // pred_check
          %p1201 = pneg %p113
        $region50: #{mlp_forward_padded.1} parent=47 // pred_check_branch
          %1203 = sbr.rel (%p1201) target = $region52
        $region51: #{mlp_forward_padded.1} parent=47 // pred_region
          %s1204 = sand.u32 %s98, 1
          %s1205 = scalar_lea.sflag [#allocation4], %s1204
          %s1206 = sand.u32 %s98, 1
          %s1207 = smul.addr %s1206, 8
          %s1208 = scalar_lea.vmem [#allocation7], %s1207
          %1210 = dma.done %s1205, 128
        $region52: #{mlp_forward_padded.1} parent=47 // pred_fallthru
          _
      $region48: #{mlp_forward_padded.1} parent=5 // pred_fallthru
        _
    $region6: #{mlp_forward_padded.1} parent=1 // loop_footer
      %s20 = sadd.s32 1, %s16
    $region7: #{mlp_forward_padded.1} parent=1 // loop_footer_branch
      %15 = sbr.rel target = $region3
    $region8: #{mlp_forward_padded.1} parent=1 // loop_exit
      _
    %1211 = vsyncpa [#allocation3], 1
    %s1212 = scalar_lea.sflag [#allocation3], 1
    %1213 = vsyncpa %s1212, 1
    %1214 = vsyncpa [#allocation6], 1
    %1215 = vsyncpa [#allocation4], 1
    %s1216 = scalar_lea.sflag [#allocation4], 1
    %1217 = vsyncpa %s1216, 1

</llo_original>
